<compile_context>
chip_gen: v7x
topology: tpu7x:2x2x1
jax: 0.10.0
libtpu: 0.0.40
codegen_flags: <defaults>
</compile_context>

<pallas_src>
import functools

import jax
import jax.numpy as jnp
import numpy as np
from jax.experimental import pallas as pl
from jax.experimental.pallas import tpu as pltpu


def para_attention_kernel(h_ref, w1wT_ref, beff_ref, vw_ref, o_ref, *,
                          approx_recip, lane_dense_softmax):
    Bb, T, H = h_ref.shape
    V = vw_ref.shape[-1]

    h3 = h_ref[...]                                   # (Bb, T, H) stream dtype
    h2 = h3.reshape(Bb * T, H)                        # layout no-op when T % 8 == 0

    # w1 + w2 = h @ W1^T + (W1_b + va @ W2^T + W2_b): one MXU pass, f32 accumulate.
    w1 = jnp.dot(h2, w1wT_ref[...],
                 preferred_element_type=jnp.float32) + beff_ref[...]     # (Bb*T, V)
    wp3 = jnp.tanh(w1).reshape(Bb, T, V)                                 # (Bb, T, V)

    h3f = h3.astype(jnp.float32)                                         # (Bb, T, H)

    if lane_dense_softmax:
        # Scores as (Bb, T) with T on the lane axis: max/exp/sum/scale run lane-dense
        # instead of at 1/128 lane occupancy when V < 128.  (v_b is folded out: it
        # cancels in the softmax over T.)
        s = jnp.sum(wp3 * vw_ref[...], axis=-1)                          # (Bb, T)
        m = jnp.max(s, axis=-1, keepdims=True)                           # (Bb, 1)
        e = jnp.exp(s - m)                                               # (Bb, T)
        denom = jnp.sum(e, axis=-1, keepdims=True)                       # (Bb, 1)
        a = (e * pl.reciprocal(denom, approx=approx_recip))[:, :, None]  # (Bb, T, 1)
    else:
        # Compatibility path (identical math, keepdims layout throughout).
        s = jnp.sum(wp3 * vw_ref[...], axis=-1, keepdims=True)           # (Bb, T, 1)
        m = jnp.max(s, axis=1, keepdims=True)
        e = jnp.exp(s - m)
        denom = jnp.sum(e, axis=1, keepdims=True)
        a = e * pl.reciprocal(denom, approx=approx_recip)                # (Bb, T, 1)

    # x = a^T @ h per batch element: broadcast multiply + sublane reduce (VPU + XLU),
    # written as one dense (Bb, H) slab.
    o_ref[...] = jnp.sum(a * h3f, axis=1)                                # (Bb, H)


def _vmem_capacity_bytes(default=128 << 20):
    """Physical VMEM of the local TPU (falls back to the v5e/v6e 128 MiB figure)."""
    try:
        return int(pltpu.get_tpu_info().vmem_capacity_bytes)
    except Exception:
        return default


def _pick_block_b(B, T, H, V, *, tile_budget_bytes, stream_itemsize,
                  prefer_min_steps=1):
    """Largest legal batch block that fits the per-step VMEM budget.

    Legal blocks divide B and keep the (block_b, H) output slab's second-minor dim
    either a multiple of 8 or the full batch (sublane tiling rule).  Blocks that
    also leave >= prefer_min_steps grid steps are preferred (megacore on v7x).
    """
    # double-buffered h tile + its f32 copy + w1/tanh slabs + output rows, per elem
    per_b = T * H * (2 * stream_itemsize + 4) + 2 * T * V * 4 + 8 * H
    candidates = sorted({d for d in range(8, B + 1, 8) if B % d == 0} | {B})
    fitting = [bb for bb in candidates if bb * per_b <= tile_budget_bytes]
    for pool in ([bb for bb in fitting if B // bb >= prefer_min_steps], fitting):
        if pool:
            return max(pool)
    # Nothing fits: smallest legal block (may spill, but never silently picks B).
    # TODO(synk): split the T axis onto a second ("arbitrary") grid dimension with a
    # two-pass softmax if even a single batch row overflows VMEM.
    return min(candidates)


def _build_call(*, B, T, H, V, block_b, approx_recip, vmem_limit_bytes,
                single_buffer_consts, lane_dense_softmax):
    kernel = functools.partial(para_attention_kernel,
                               approx_recip=approx_recip,
                               lane_dense_softmax=lane_dense_softmax)
    const_kw = {"pipeline_mode": pl.Buffered(1)} if single_buffer_consts else {}
    grid = (B // block_b,)

    return pl.pallas_call(
        kernel,
        out_shape=jax.ShapeDtypeStruct((B, H), jnp.float32),
        grid_spec=pltpu.PrefetchScalarGridSpec(
            num_scalar_prefetch=0,
            grid=grid,
            in_specs=[
                pl.BlockSpec((block_b, T, H), lambda b: (b, 0, 0)),        # h tile
                pl.BlockSpec((H, V), lambda b: (0, 0), **const_kw),        # W1^T
                pl.BlockSpec((1, V), lambda b: (0, 0), **const_kw),        # folded bias
                pl.BlockSpec((1, 1, V), lambda b: (0, 0, 0), **const_kw),  # v weight
            ],
            out_specs=pl.BlockSpec((block_b, H), lambda b: (b, 0)),        # dense slab
        ),
        compiler_params=pltpu.CompilerParams(
            dimension_semantics=("parallel",),
            vmem_limit_bytes=vmem_limit_bytes),
    )


def para_attention_unit(h, params, *, block_b=None, stream_dtype=jnp.bfloat16,
                        approx_recip=True):
    """h: (B, T, h_size) -> (B, h_size) float32."""
    B, T, H = h.shape
    V = params["W1_w"].shape[0]
    stream_dtype = jnp.dtype(stream_dtype)

    # The in-kernel (Bb,T,H)->(Bb*T,H) reshape is a layout no-op only for T % 8 == 0.
    # TODO(synk): pad T to a multiple of 8 and mask padded scores with -inf for
    # ragged sequence lengths.
    assert T % 8 == 0, "T must be a multiple of 8 (pad the time axis)"

    # Host-side, once: pre-transpose W1 and fold the batch-invariant W2 path into the
    # bias: b_eff = W1_b + (va @ W2^T + W2_b).  v_b is dropped (cancels in softmax).
    w1wT = jnp.asarray(params["W1_w"], jnp.float32).T.astype(stream_dtype)   # (H, V)
    w2 = (jnp.asarray(params["va"], jnp.float32)[None, :]
          @ jnp.asarray(params["W2_w"], jnp.float32).T
          + jnp.asarray(params["W2_b"], jnp.float32))                        # (1, V)
    b_eff = (jnp.asarray(params["W1_b"], jnp.float32)[None, :]
             + w2).astype(jnp.float32)                                       # (1, V)
    vw = jnp.asarray(params["v_w"], jnp.float32).reshape(1, 1, V)            # (1, 1, V)

    # Generation-aware sizing: explicit scoped-VMEM limit + largest legal batch block
    # that fits; on v7x-class parts (<= 64 MiB VMEM per TC, 2 TCs) keep >= 2 grid
    # steps so dimension_semantics=("parallel",) can shard across both cores.
    vmem_cap = _vmem_capacity_bytes()
    vmem_limit = int(min(vmem_cap * 3 // 4, 96 << 20))
    sb = stream_dtype.itemsize
    fixed = 2 * (H * V * sb + 2 * V * 4)             # resident weight / bias buffers
    tile_budget = max(1 << 20, vmem_limit - fixed - (8 << 20))
    prefer_min_steps = 2 if (vmem_cap <= (64 << 20) and B > 1) else 1

    if block_b is None:
        block_b = _pick_block_b(B, T, H, V, tile_budget_bytes=tile_budget,
                                stream_itemsize=sb,
                                prefer_min_steps=prefer_min_steps)
    assert B % block_b == 0, "block_b must divide B"

    h_in = jnp.asarray(h).astype(stream_dtype)
    args = (h_in, w1wT, b_eff, vw)

    def _run(fast):
        call = _build_call(B=B, T=T, H=H, V=V, block_b=block_b,
                           approx_recip=approx_recip,
                           vmem_limit_bytes=vmem_limit,
                           single_buffer_consts=fast,
                           lane_dense_softmax=fast)
        return call(*args)

    try:
        return _run(True)
    except Exception:
        # Compatibility fallback: some lowerings reject pl.Buffered(1) or the
        # lane-dense softmax relayout; the math is identical either way.
        return _run(False)


def para_attention_ref(h, params):
    """Pure-JAX reference mirroring the PyTorch forward."""
    w1 = h @ params["W1_w"].T + params["W1_b"]                      # (B, T, V)
    w2 = params["va"][None, :] @ params["W2_w"].T + params["W2_b"]  # (1, V)
    w_plus = jnp.tanh(w1 + w2)
    s = (w_plus @ params["v_w"].T + params["v_b"])[..., 0]          # (B, T)
    a = jax.nn.softmax(s, axis=1)                                   # (B, T)
    return jnp.einsum("bt,bth->bh", a, h)                           # (B, H)


if __name__ == "__main__":
    # Small shapes consistent with the module's forward.
    B, T = 2, 8
    h_size, v_size, va_size = 32, 32, 16

    key = jax.random.PRNGKey(0)
    keys = jax.random.split(key, 8)

    params = {
        "va":   jax.random.normal(keys[0], (va_size,), jnp.float32),
        "W1_w": jax.random.normal(keys[1], (v_size, h_size), jnp.float32) * 0.1,
        "W1_b": jax.random.normal(keys[2], (v_size,), jnp.float32) * 0.1,
        "W2_w": jax.random.normal(keys[3], (v_size, va_size), jnp.float32) * 0.1,
        "W2_b": jax.random.normal(keys[4], (v_size,), jnp.float32) * 0.1,
        "v_w":  jax.random.normal(keys[5], (1, v_size), jnp.float32) * 0.1,
        "v_b":  jax.random.normal(keys[6], (1,), jnp.float32) * 0.1,
    }
    h = jax.random.normal(keys[7], (B, T, h_size), jnp.float32)

    ref = jax.block_until_ready(para_attention_ref(h, params))

    # Default path: bf16-streamed h (halves the dominant HBM traffic) + EUP
    # approximate reciprocal for the softmax denominator.
    out = jax.block_until_ready(para_attention_unit(h, params))
    np.testing.assert_allclose(np.asarray(out), np.asarray(ref), rtol=2e-2, atol=2e-2)

    # Exact path: f32 streaming + exact reciprocal matches the reference tightly.
    out_exact = jax.block_until_ready(
        para_attention_unit(h, params, stream_dtype=jnp.float32, approx_recip=False))
    np.testing.assert_allclose(np.asarray(out_exact), np.asarray(ref),
                               rtol=1e-5, atol=1e-5)

    print("KERNEL_OK")
</pallas_src>

<mosaic_0001>
module attributes {stable_mosaic.version = 11 : i64} {
  func.func @para_attention_kernel(%arg0: i32, %arg1: memref<2x8x32xbf16, #tpu.memory_space<vmem>>, %arg2: memref<32x32xbf16, #tpu.memory_space<vmem>>, %arg3: memref<1x32xf32, #tpu.memory_space<vmem>>, %arg4: memref<1x1x32xf32, #tpu.memory_space<vmem>>, %arg5: memref<2x32xf32, #tpu.memory_space<vmem>>) attributes {dimension_semantics = [#tpu.dimension_semantics<parallel>], iteration_bounds = array<i64: 1>, scalar_prefetch = 0 : i64, scratch_operands = 0 : i64, tpu.core_type = #tpu.core_type<tc>, window_params = [{transform_indices = @transform_0, window_bounds = array<i64: 2, 8, 32>}, {pipeline_mode = #tpu.pipeline_mode<synchronous>, transform_indices = @transform_1, window_bounds = array<i64: 32, 32>}, {pipeline_mode = #tpu.pipeline_mode<synchronous>, transform_indices = @transform_2, window_bounds = array<i64: 1, 32>}, {pipeline_mode = #tpu.pipeline_mode<synchronous>, transform_indices = @transform_3, window_bounds = array<i64: 1, 1, 32>}, {transform_indices = @transform_4, window_bounds = array<i64: 2, 32>}]} {
    %c0 = arith.constant 0 : index
    %c0_0 = arith.constant 0 : index
    %c0_1 = arith.constant 0 : index
    %0 = vector.load %arg1[%c0, %c0_0, %c0_1] : memref<2x8x32xbf16, #tpu.memory_space<vmem>>, vector<2x8x32xbf16>
    %1 = vector.shape_cast %0 : vector<2x8x32xbf16> to vector<16x32xbf16>
    %c0_2 = arith.constant 0 : index
    %c0_3 = arith.constant 0 : index
    %2 = vector.load %arg2[%c0_2, %c0_3] : memref<32x32xbf16, #tpu.memory_space<vmem>>, vector<32x32xbf16>
    %cst = arith.constant dense<0.000000e+00> : vector<16x32xf32>
    %3 = tpu.matmul %1, %2, %cst {dimension_numbers = #tpu.dot_dimension_numbers<[1], [0], [0], [1], [0, 0, 1, 1], [], []>} : vector<16x32xbf16>, vector<32x32xbf16>, vector<16x32xf32> -> vector<16x32xf32>
    %c0_4 = arith.constant 0 : index
    %c0_5 = arith.constant 0 : index
    %4 = vector.load %arg3[%c0_4, %c0_5] : memref<1x32xf32, #tpu.memory_space<vmem>>, vector<1x32xf32>
    %5 = vector.broadcast %4 : vector<1x32xf32> to vector<16x32xf32>
    %6 = arith.addf %3, %5 : vector<16x32xf32>
    %7 = math.tanh %6 : vector<16x32xf32>
    %8 = vector.shape_cast %7 : vector<16x32xf32> to vector<2x8x32xf32>
    %9 = arith.extf %0 : vector<2x8x32xbf16> to vector<2x8x32xf32>
    %c0_6 = arith.constant 0 : index
    %c0_7 = arith.constant 0 : index
    %c0_8 = arith.constant 0 : index
    %10 = vector.load %arg4[%c0_6, %c0_7, %c0_8] : memref<1x1x32xf32, #tpu.memory_space<vmem>>, vector<1x1x32xf32>
    %11 = vector.broadcast %10 : vector<1x1x32xf32> to vector<2x8x32xf32>
    %12 = arith.mulf %8, %11 : vector<2x8x32xf32>
    %cst_9 = arith.constant dense<0.000000e+00> : vector<2x8xf32>
    %13 = vector.multi_reduction <add>, %12, %cst_9 [2] : vector<2x8x32xf32> to vector<2x8xf32>
    %cst_10 = arith.constant dense<0xFF800000> : vector<2xf32>
    %14 = vector.multi_reduction <maximumf>, %13, %cst_10 [1] : vector<2x8xf32> to vector<2xf32>
    %15 = vector.shape_cast %14 : vector<2xf32> to vector<2x1xf32>
    %16 = vector.broadcast %15 : vector<2x1xf32> to vector<2x8xf32>
    %17 = arith.subf %13, %16 : vector<2x8xf32>
    %18 = math.exp %17 : vector<2x8xf32>
    %cst_11 = arith.constant dense<0.000000e+00> : vector<2xf32>
    %19 = vector.multi_reduction <add>, %18, %cst_11 [1] : vector<2x8xf32> to vector<2xf32>
    %20 = vector.shape_cast %19 : vector<2xf32> to vector<2x1xf32>
    %21 = tpu.reciprocal %20 {approx = true} : vector<2x1xf32> -> vector<2x1xf32>
    %22 = vector.broadcast %21 : vector<2x1xf32> to vector<2x8xf32>
    %23 = arith.mulf %18, %22 : vector<2x8xf32>
    %24 = vector.shape_cast %23 : vector<2x8xf32> to vector<2x8x1xf32>
    %25 = vector.broadcast %24 : vector<2x8x1xf32> to vector<2x8x32xf32>
    %26 = arith.mulf %25, %9 : vector<2x8x32xf32>
    %cst_12 = arith.constant dense<0.000000e+00> : vector<2x32xf32>
    %27 = vector.multi_reduction <add>, %26, %cst_12 [1] : vector<2x8x32xf32> to vector<2x32xf32>
    %c0_13 = arith.constant 0 : index
    %c0_14 = arith.constant 0 : index
    %28 = vector.load %arg5[%c0_13, %c0_14] : memref<2x32xf32, #tpu.memory_space<vmem>>, vector<2x32xf32>
    tpu.vector_store %arg5[%c0_13, %c0_14], %27 {strides = array<i32>} : memref<2x32xf32, #tpu.memory_space<vmem>>, vector<2x32xf32>,
    return
  }
  func.func @transform_0(%arg0: i32) -> (i32, i32, i32) {
    %c0_i32 = arith.constant 0 : i32
    %c0_i32_0 = arith.constant 0 : i32
    %c0_i32_1 = arith.constant 0 : i32
    return %arg0, %c0_i32, %c0_i32_0 : i32, i32, i32
  }
  func.func @transform_1(%arg0: i32) -> (i32, i32) {
    %c0_i32 = arith.constant 0 : i32
    %c0_i32_0 = arith.constant 0 : i32
    %c0_i32_1 = arith.constant 0 : i32
    return %c0_i32, %c0_i32_0 : i32, i32
  }
  func.func @transform_2(%arg0: i32) -> (i32, i32) {
    %c0_i32 = arith.constant 0 : i32
    %c0_i32_0 = arith.constant 0 : i32
    %c0_i32_1 = arith.constant 0 : i32
    return %c0_i32, %c0_i32_0 : i32, i32
  }
  func.func @transform_3(%arg0: i32) -> (i32, i32, i32) {
    %c0_i32 = arith.constant 0 : i32
    %c0_i32_0 = arith.constant 0 : i32
    %c0_i32_1 = arith.constant 0 : i32
    %c0_i32_2 = arith.constant 0 : i32
    return %c0_i32, %c0_i32_0, %c0_i32_1 : i32, i32, i32
  }
  func.func @transform_4(%arg0: i32) -> (i32, i32) {
    %c0_i32 = arith.constant 0 : i32
    %c0_i32_0 = arith.constant 0 : i32
    return %arg0, %c0_i32 : i32, i32
  }
}

module attributes {stable_mosaic.version = 11 : i64} {
  func.func @para_attention_kernel(%arg0: i32, %arg1: memref<2x8x32xbf16, #tpu.memory_space<vmem>>, %arg2: memref<32x32xbf16, #tpu.memory_space<vmem>>, %arg3: memref<1x32xf32, #tpu.memory_space<vmem>>, %arg4: memref<1x1x32xf32, #tpu.memory_space<vmem>>, %arg5: memref<2x32xf32, #tpu.memory_space<vmem>>) attributes {dimension_semantics = [#tpu.dimension_semantics<parallel>], iteration_bounds = array<i64: 1>, scalar_prefetch = 0 : i64, scratch_operands = 0 : i64, tpu.core_type = #tpu.core_type<tc>, window_params = [{transform_indices = @transform_0, window_bounds = array<i64: 2, 8, 32>}, {pipeline_mode = #tpu.pipeline_mode<synchronous>, transform_indices = @transform_1, window_bounds = array<i64: 32, 32>}, {pipeline_mode = #tpu.pipeline_mode<synchronous>, transform_indices = @transform_2, window_bounds = array<i64: 1, 32>}, {pipeline_mode = #tpu.pipeline_mode<synchronous>, transform_indices = @transform_3, window_bounds = array<i64: 1, 1, 32>}, {transform_indices = @transform_4, window_bounds = array<i64: 2, 32>}]} {
    %c0 = arith.constant 0 : index
    %c0_0 = arith.constant 0 : index
    %c0_1 = arith.constant 0 : index
    %0 = vector.load %arg1[%c0, %c0_0, %c0_1] : memref<2x8x32xbf16, #tpu.memory_space<vmem>>, vector<2x8x32xbf16>
    %1 = vector.shape_cast %0 : vector<2x8x32xbf16> to vector<16x32xbf16>
    %c0_2 = arith.constant 0 : index
    %c0_3 = arith.constant 0 : index
    %2 = vector.load %arg2[%c0_2, %c0_3] : memref<32x32xbf16, #tpu.memory_space<vmem>>, vector<32x32xbf16>
    %cst = arith.constant dense<0.000000e+00> : vector<16x32xf32>
    %3 = tpu.matmul %1, %2, %cst {dimension_numbers = #tpu.dot_dimension_numbers<[1], [0], [0], [1], [0, 0, 1, 1], [], []>} : vector<16x32xbf16>, vector<32x32xbf16>, vector<16x32xf32> -> vector<16x32xf32>
    %c0_4 = arith.constant 0 : index
    %c0_5 = arith.constant 0 : index
    %4 = vector.load %arg3[%c0_4, %c0_5] : memref<1x32xf32, #tpu.memory_space<vmem>>, vector<1x32xf32>
    %5 = vector.broadcast %4 : vector<1x32xf32> to vector<16x32xf32>
    %6 = arith.addf %3, %5 : vector<16x32xf32>
    %7 = math.tanh %6 : vector<16x32xf32>
    %8 = vector.shape_cast %7 : vector<16x32xf32> to vector<2x8x32xf32>
    %9 = arith.extf %0 : vector<2x8x32xbf16> to vector<2x8x32xf32>
    %c0_6 = arith.constant 0 : index
    %c0_7 = arith.constant 0 : index
    %c0_8 = arith.constant 0 : index
    %10 = vector.load %arg4[%c0_6, %c0_7, %c0_8] : memref<1x1x32xf32, #tpu.memory_space<vmem>>, vector<1x1x32xf32>
    %11 = vector.broadcast %10 : vector<1x1x32xf32> to vector<2x8x32xf32>
    %12 = arith.mulf %8, %11 : vector<2x8x32xf32>
    %cst_9 = arith.constant dense<0.000000e+00> : vector<2x8xf32>
    %13 = vector.multi_reduction <add>, %12, %cst_9 [2] : vector<2x8x32xf32> to vector<2x8xf32>
    %14 = vector.shape_cast %13 : vector<2x8xf32> to vector<2x8x1xf32>
    %cst_10 = arith.constant dense<0xFF800000> : vector<2x1xf32>
    %15 = vector.multi_reduction <maximumf>, %14, %cst_10 [1] : vector<2x8x1xf32> to vector<2x1xf32>
    %16 = vector.shape_cast %15 : vector<2x1xf32> to vector<2x1x1xf32>
    %17 = vector.broadcast %16 : vector<2x1x1xf32> to vector<2x8x1xf32>
    %18 = arith.subf %14, %17 : vector<2x8x1xf32>
    %19 = math.exp %18 : vector<2x8x1xf32>
    %cst_11 = arith.constant dense<0.000000e+00> : vector<2x1xf32>
    %20 = vector.multi_reduction <add>, %19, %cst_11 [1] : vector<2x8x1xf32> to vector<2x1xf32>
    %21 = vector.shape_cast %20 : vector<2x1xf32> to vector<2x1x1xf32>
    %22 = tpu.reciprocal %21 {approx = true} : vector<2x1x1xf32> -> vector<2x1x1xf32>
    %23 = vector.broadcast %22 : vector<2x1x1xf32> to vector<2x8x1xf32>
    %24 = arith.mulf %19, %23 : vector<2x8x1xf32>
    %25 = vector.broadcast %24 : vector<2x8x1xf32> to vector<2x8x32xf32>
    %26 = arith.mulf %25, %9 : vector<2x8x32xf32>
    %cst_12 = arith.constant dense<0.000000e+00> : vector<2x32xf32>
    %27 = vector.multi_reduction <add>, %26, %cst_12 [1] : vector<2x8x32xf32> to vector<2x32xf32>
    %c0_13 = arith.constant 0 : index
    %c0_14 = arith.constant 0 : index
    %28 = vector.load %arg5[%c0_13, %c0_14] : memref<2x32xf32, #tpu.memory_space<vmem>>, vector<2x32xf32>
    tpu.vector_store %arg5[%c0_13, %c0_14], %27 {strides = array<i32>} : memref<2x32xf32, #tpu.memory_space<vmem>>, vector<2x32xf32>,
    return
  }
  func.func @transform_0(%arg0: i32) -> (i32, i32, i32) {
    %c0_i32 = arith.constant 0 : i32
    %c0_i32_0 = arith.constant 0 : i32
    %c0_i32_1 = arith.constant 0 : i32
    return %arg0, %c0_i32, %c0_i32_0 : i32, i32, i32
  }
  func.func @transform_1(%arg0: i32) -> (i32, i32) {
    %c0_i32 = arith.constant 0 : i32
    %c0_i32_0 = arith.constant 0 : i32
    %c0_i32_1 = arith.constant 0 : i32
    return %c0_i32, %c0_i32_0 : i32, i32
  }
  func.func @transform_2(%arg0: i32) -> (i32, i32) {
    %c0_i32 = arith.constant 0 : i32
    %c0_i32_0 = arith.constant 0 : i32
    %c0_i32_1 = arith.constant 0 : i32
    return %c0_i32, %c0_i32_0 : i32, i32
  }
  func.func @transform_3(%arg0: i32) -> (i32, i32, i32) {
    %c0_i32 = arith.constant 0 : i32
    %c0_i32_0 = arith.constant 0 : i32
    %c0_i32_1 = arith.constant 0 : i32
    %c0_i32_2 = arith.constant 0 : i32
    return %c0_i32, %c0_i32_0, %c0_i32_1 : i32, i32, i32
  }
  func.func @transform_4(%arg0: i32) -> (i32, i32) {
    %c0_i32 = arith.constant 0 : i32
    %c0_i32_0 = arith.constant 0 : i32
    return %arg0, %c0_i32 : i32, i32
  }
}

</mosaic_0001>

<llo_original>
// kernel: tpu_custom_call.1
$region0: #{tpu_custom_call.1}
  #allocation0 [shape = 'u32[]', space=smem, size = 0x4, offset = 0x4, fixed_abs, tag = 'smem constant byte address 0x4 - core index']
  #allocation1 [shape = 'u32[144,128]{1,0:T(1,128)}', space=vmem, size = 0x12000, scoped, tag = 'internal scratch']
  %s0 = inlined_call_operand.hbm [shape: bf16[2,8,32], index: 0, kind: input, shape index: {}]
  %s1 = inlined_call_operand.hbm [shape: bf16[32,32], index: 1, kind: input, shape index: {}]
  %s2 = inlined_call_operand.hbm [shape: f32[1,32], index: 2, kind: input, shape index: {}]
  %s3 = inlined_call_operand.hbm [shape: f32[1,1,32], index: 3, kind: input, shape index: {}]
  %s4 = inlined_call_operand.hbm [shape: f32[2,32], index: 4, kind: output, shape index: {}]
  %s5 = sld [smem:[#allocation0]]
  $region42: #{tpu_custom_call.1} parent=0
    _
  %s7 = ssub.s32 1, %s5
  %s8 = scalar_select 0, %s7, %s5
  $region1: #{tpu_custom_call.1} parent=0
    #allocation2 [shape = 'u8[4096]{0}', space=vmem, size = 0x1000, scoped, tag = 'input window, operand 0, single buffered']
    #allocation3 [shape = 's32[1]{0}', space=sflag, size = 0x4, scoped, tag = 'scoped memory for tpu_custom_call.1']
    #allocation4 [shape = 's32[1]{0}', space=sflag, size = 0x4, scoped, tag = 'scoped memory for tpu_custom_call.1']
    #allocation5 [shape = 'u8[8192]{0}', space=vmem, size = 0x2000, scoped, tag = 'input window, operand 1, single buffered']
    #allocation6 [shape = 's32[1]{0}', space=sflag, size = 0x4, scoped, tag = 'scoped memory for tpu_custom_call.1']
    #allocation7 [shape = 'u8[512]{0}', space=vmem, size = 0x400, scoped, tag = 'input window, operand 2, single buffered']
    #allocation8 [shape = 'u8[512]{0}', space=vmem, size = 0x400, scoped, tag = 'input window, operand 3, single buffered']
    #allocation9 [shape = 's32[1]{0}', space=sflag, size = 0x4, scoped, tag = 'scoped memory for tpu_custom_call.1']
    #allocation10 [shape = 'u8[1024]{0}', space=vmem, size = 0x400, scoped, tag = 'output window, operand 0, single buffered']
    %9 = vsyncpa [#allocation3], 0
    %10 = vsyncpa [#allocation6], 0
    %11 = vsyncpa [#allocation9], 0
    %12 = vsyncpa [#allocation4], 0
    // Predicated region
    $region2: #{tpu_custom_call.1} parent=1 // pred_check
      _
    $region3: #{tpu_custom_call.1} parent=1 // pred_check_branch
      %14 = sbr.rel (0) target = $region5
    $region4: #{tpu_custom_call.1} parent=1 // pred_region
      %s16 = ssub.s32 128, 128
      %17 = vsyncadd [#allocation3], %s16
      %s18 = sshll.u32 [#allocation2], 4
      %s19 = int_to_ptr.vmem [resolvable:$true] %s18
      %24 = dma.hbm_to_vmem [thread:$0]  %s0, 128, %s19, [#allocation3], 64, 64, 4
    $region5: #{tpu_custom_call.1} parent=1 // pred_fallthru
      _
    // Predicated region
    $region6: #{tpu_custom_call.1} parent=1 // pred_check
      _
    $region7: #{tpu_custom_call.1} parent=1 // pred_check_branch
      %26 = sbr.rel (0) target = $region9
    $region8: #{tpu_custom_call.1} parent=1 // pred_region
      %s28 = ssub.s32 256, 256
      %29 = vsyncadd [#allocation6], %s28
      %s30 = sshll.u32 [#allocation5], 4
      %s31 = int_to_ptr.vmem [resolvable:$true] %s30
      %36 = dma.hbm_to_vmem [thread:$0]  %s1, 256, %s31, [#allocation6], 64, 64, 4
    $region9: #{tpu_custom_call.1} parent=1 // pred_fallthru
      _
    // Predicated region
    $region10: #{tpu_custom_call.1} parent=1 // pred_check
      _
    $region11: #{tpu_custom_call.1} parent=1 // pred_check_branch
      %38 = sbr.rel (0) target = $region13
    $region12: #{tpu_custom_call.1} parent=1 // pred_region
      %s40 = ssub.s32 16, 16
      %41 = vsyncadd [#allocation6], %s40
      %s43 = sshll.u32 [#allocation7], 4
      %s44 = int_to_ptr.vmem [resolvable:$true] %s43
      %46 = dma.hbm_to_vmem [thread:$0]  %s2, 16, %s44, [#allocation6]
    $region13: #{tpu_custom_call.1} parent=1 // pred_fallthru
      _
    // Predicated region
    $region14: #{tpu_custom_call.1} parent=1 // pred_check
      _
    $region15: #{tpu_custom_call.1} parent=1 // pred_check_branch
      %48 = sbr.rel (0) target = $region17
    $region16: #{tpu_custom_call.1} parent=1 // pred_region
      %s50 = ssub.s32 16, 16
      %51 = vsyncadd [#allocation9], %s50
      %s53 = sshll.u32 [#allocation8], 4
      %s54 = int_to_ptr.vmem [resolvable:$true] %s53
      %56 = dma.hbm_to_vmem [thread:$0]  %s3, 16, %s54, [#allocation9]
    $region17: #{tpu_custom_call.1} parent=1 // pred_fallthru
      _
    // Predicated region
    $region18: #{tpu_custom_call.1} parent=1 // pred_check
      _
    $region19: #{tpu_custom_call.1} parent=1 // pred_check_branch
      %58 = sbr.rel (0) target = $region21
    $region20: #{tpu_custom_call.1} parent=1 // pred_region
      %59 = dma.done [#allocation3], 128
    $region21: #{tpu_custom_call.1} parent=1 // pred_fallthru
      _
    // Predicated region
    $region22: #{tpu_custom_call.1} parent=1 // pred_check
      _
    $region23: #{tpu_custom_call.1} parent=1 // pred_check_branch
      %61 = sbr.rel (0) target = $region25
    $region24: #{tpu_custom_call.1} parent=1 // pred_region
      %62 = dma.done [#allocation6], 256
    $region25: #{tpu_custom_call.1} parent=1 // pred_fallthru
      _
    // Predicated region
    $region26: #{tpu_custom_call.1} parent=1 // pred_check
      _
    $region27: #{tpu_custom_call.1} parent=1 // pred_check_branch
      %64 = sbr.rel (0) target = $region29
    $region28: #{tpu_custom_call.1} parent=1 // pred_region
      %65 = dma.done [#allocation6], 16
    $region29: #{tpu_custom_call.1} parent=1 // pred_fallthru
      _
    // Predicated region
    $region30: #{tpu_custom_call.1} parent=1 // pred_check
      _
    $region31: #{tpu_custom_call.1} parent=1 // pred_check_branch
      %67 = sbr.rel (0) target = $region33
    $region32: #{tpu_custom_call.1} parent=1 // pred_region
      %68 = dma.done [#allocation9], 16
    $region33: #{tpu_custom_call.1} parent=1 // pred_fallthru
      _
    %v70 = vld [vmem:[#allocation2] sm:$0xf]
    %v71 = vld [vmem:[#allocation2 + $0x4] sm:$0xf]
    %v72 = vld [vmem:[#allocation5] sm:$0xf]
    %v73 = vld [vmem:[#allocation5 + $0x4] sm:$0xf]
    %v74 = vld [vmem:[#allocation5 + $0x8] sm:$0xf]
    %v75 = vld [vmem:[#allocation5 + $0xc] sm:$0xf]
    %v76 = vld [vmem:[#allocation7] sm:$0x1]
    %v78 = vlaneseq
    %v79 = vshrl.u32 %v78, 7
    %v80 = vsub.s32 0, %v79
    %v81 = vrot.slane %v76, %v80
    %v85 = vunpack.c.l.b16 %v70
    %v86 = vunpack.c.l.b16 %v71
    %v87 = vpack.c.b16 %v86, %v85
    %v92 = vunpack.c.l.b16 %v72
    %v93 = vunpack.c.l.b16 %v73
    %v94 = vunpack.c.l.b16 %v74
    %v95 = vunpack.c.l.b16 %v75
    %v96 = vpack.c.b16 %v93, %v92
    %v97 = vpack.c.b16 %v95, %v94
    %vm100 = vcmask 261120
    %v102 = vsel %vm100, %v87, 0
    %104 = vmatprep.subr.bf16.mxu0 0
    %105 = vmatpush1.bf16.msra.mxu0 %v96
    %106 = vmatprep.subr.bf16.mxu0 0
    %107 = vmatpush1.bf16.msra.mxu0 %v97
    %108 = vmatprep.subr.bf16.mxu0 0
    %109 = vmatpush1.bf16.msra.mxu0 0
    %110 = vmatprep.subr.bf16.mxu0 0
    %111 = vmatpush1.bf16.msra.mxu0 0
    %112 = vmatprep.subr.bf16.mxu0 0
    %113 = vmatpush1.bf16.msra.mxu0 0
    %114 = vmatprep.subr.bf16.mxu0 0
    %115 = vmatpush1.bf16.msra.mxu0 0
    %116 = vmatprep.subr.bf16.mxu0 0
    %117 = vmatpush1.bf16.msra.mxu0 0
    %118 = vmatprep.subr.bf16.mxu0 0
    %119 = vmatpush1.bf16.msra.mxu0 0
    %120 = vmatprep.subr.bf16.mxu0 0
    %121 = vmatpush1.bf16.msra.mxu0 0
    %122 = vmatprep.subr.bf16.mxu0 0
    %123 = vmatpush1.bf16.msra.mxu0 0
    %124 = vmatprep.subr.bf16.mxu0 0
    %125 = vmatpush1.bf16.msra.mxu0 0
    %126 = vmatprep.subr.bf16.mxu0 0
    %127 = vmatpush1.bf16.msra.mxu0 0
    %128 = vmatprep.subr.bf16.mxu0 0
    %129 = vmatpush1.bf16.msra.mxu0 0
    %130 = vmatprep.subr.bf16.mxu0 0
    %131 = vmatpush1.bf16.msra.mxu0 0
    %132 = vmatprep.subr.bf16.mxu0 0
    %133 = vmatpush1.bf16.msra.mxu0 0
    %134 = vmatprep.subr.bf16.mxu0 0
    %135 = vmatpush1.bf16.msra.mxu0 0
    %136 = vmatprep.mubr.bf16.mxu0 0
    %137 = vmatmul.mubr.bf16.gmra.mrb[0].mxu0 %v102
    %v138 = vpop.f32.mrb[0].mxu0
    %v139 = vadd.f32 %v81, %v138
    %v140 = vpop.f32.mrb[0].mxu0
    %v141 = vpop.f32.mrb[0].mxu0
    %v142 = vadd.f32 %v81, %v141
    %v143 = vpop.f32.mrb[0].mxu0
    %144 = vdwg.mxu0
    %v145 = vtanh.pop %v139
    %v146 = vtanh.pop %v142
    %v147 = vunpack.c.l.bf16 %v70
    %v148 = vunpack.c.l.bf16 %v71
    %v149 = vld [vmem:[#allocation8] sm:$0x1]
    %v151 = vlaneseq
    %v152 = vshrl.u32 %v151, 7
    %v153 = vsub.s32 0, %v152
    %v154 = vrot.slane %v149, %v153
    %v156 = vmul.f32 %v145, %v154
    %v157 = vmul.f32 %v146, %v154
    %v158 = vsel %vm100, %v156, 0.0
    %159 = vadd.xlane.f32.xlu0 %v158
    %v160 = vpop.xlane.xlu0 %159
    %v161 = vsel %vm100, %v157, 0.0
    %162 = vadd.xlane.f32.xlu0 %v161
    %v163 = vpop.xlane.xlu0 %162
    %v166 = vlaneseq
    %v167 = vand.u32 %v166, 127
    %v168 = vlaneseq
    %v169 = vshrl.u32 %v168, 7
    %v170 = vsub.s32 %v167, %v169
    %v171 = vrot.slane %v160, %v170
    %v172 = vlaneseq
    %v173 = vshrl.u32 %v172, 7
    %v174 = vsub.s32 %v167, %v173
    %v175 = vrot.slane %v163, %v174
    %vm176 = vcmask 1041409
    %v177 = vsel %vm176, %v175, %v171
    %vm179 = vcmask 58368
    %v180 = vsel %vm179, %v177, -inf
    %181 = vmax.xlane.f32.xlu0 %v180
    %v182 = vpop.xlane.xlu0 %181
    %v184 = vlaneseq
    %v185 = vshrl.u32 %v184, 7
    %v186 = vsub.s32 0, %v185
    %v187 = vrot.slane %v182, %v186
    %v188 = vlaneseq
    %v189 = vshrl.u32 %v188, 7
    %v190 = vsub.s32 1, %v189
    %v191 = vrot.slane %v182, %v190
    %v194 = vsub.f32 %v160, %v187
    %v195 = vsub.f32 %v163, %v191
    %v196 = vmul.f32 %v194, 1.442695
    %v197 = vpow.pop %v196
    %v198 = vmul.f32 %v195, 1.442695
    %v199 = vpow.pop %v198
    %202 = vset.pattern.permute.xlu0 0
    %203 = vperm.xlu0 %202, %v197
    %v204 = vpop.permute.xlu0 %203
    %205 = vset.pattern.permute.xlu0 0
    %206 = vperm.xlu0 %205, %v199
    %v207 = vpop.permute.xlu0 %206
    %v208 = vlaneseq
    %v209 = vshrl.u32 %v208, 7
    %v210 = vsub.s32 %v167, %v209
    %v211 = vrot.slane %v204, %v210
    %v212 = vlaneseq
    %v213 = vshrl.u32 %v212, 7
    %v214 = vsub.s32 %v167, %v213
    %v215 = vrot.slane %v207, %v214
    %v216 = vsel %vm176, %v215, %v211
    %v218 = vsel %vm179, %v216, 0.0
    %219 = vadd.xlane.f32.xlu0 %v218
    %v220 = vpop.xlane.xlu0 %219
    %v221 = vrcp.pop %v220
    %v223 = vlaneseq
    %v224 = vshrl.u32 %v223, 7
    %v225 = vsub.s32 0, %v224
    %v226 = vrot.slane %v221, %v225
    %v227 = vlaneseq
    %v228 = vshrl.u32 %v227, 7
    %v229 = vsub.s32 1, %v228
    %v230 = vrot.slane %v221, %v229
    %v233 = vmul.f32 %v197, %v226
    %v234 = vmul.f32 %v199, %v230
    %236 = vset.pattern.permute.xlu0 0
    %237 = vperm.xlu0 %236, %v233
    %v238 = vpop.permute.xlu0 %237
    %241 = vset.pattern.permute.xlu0 0
    %242 = vperm.xlu0 %241, %v234
    %v243 = vpop.permute.xlu0 %242
    %v245 = vmul.f32 %v238, %v147
    %v246 = vmul.f32 %v243, %v148
    %v247 = vsel %vm100, %v245, 0.0
    %v248 = vrot.slane %v247, 4
    %v249 = vadd.f32 %v247, %v248
    %v250 = vrot.slane %v249, 2
    %v251 = vadd.f32 %v249, %v250
    %v252 = vrot.slane %v251, 1
    %v253 = vadd.f32 %v251, %v252
    %v254 = vsel %vm100, %v246, 0.0
    %v255 = vrot.slane %v254, 4
    %v256 = vadd.f32 %v254, %v255
    %v257 = vrot.slane %v256, 2
    %v258 = vadd.f32 %v256, %v257
    %v259 = vrot.slane %v258, 1
    %v260 = vadd.f32 %v258, %v259
    %v263 = vsel %vm176, %v260, %v253
    %vm265 = vcmask 254976
    %266 = vst.msk [vmem:[#allocation10] sm:$0x3] %vm265, %v263
    // Predicated region
    $region34: #{tpu_custom_call.1} parent=1 // pred_check
      _
    $region35: #{tpu_custom_call.1} parent=1 // pred_check_branch
      %268 = sbr.rel (0) target = $region37
    $region36: #{tpu_custom_call.1} parent=1 // pred_region
      %s270 = ssub.s32 32, 32
      %271 = vsyncadd [#allocation4], %s270
      %s273 = sshll.u32 [#allocation10], 4
      %s274 = int_to_ptr.vmem [resolvable:$true] %s273
      %276 = dma.vmem_to_hbm [thread:$0]  %s274, 32, %s4, [#allocation4]
    $region37: #{tpu_custom_call.1} parent=1 // pred_fallthru
      _
    // Predicated region
    $region38: #{tpu_custom_call.1} parent=1 // pred_check
      _
    $region39: #{tpu_custom_call.1} parent=1 // pred_check_branch
      %278 = sbr.rel (0) target = $region41
    $region40: #{tpu_custom_call.1} parent=1 // pred_region
      %279 = dma.done [#allocation4], 32
    $region41: #{tpu_custom_call.1} parent=1 // pred_fallthru
      _
    %280 = vsyncpa [#allocation3], 1
    %281 = vsyncpa [#allocation6], 1
    %282 = vsyncpa [#allocation9], 1
    %283 = vsyncpa [#allocation4], 1

// kernel: tpu_custom_call.1
$region0: #{tpu_custom_call.1}
  #allocation0 [shape = 'u32[]', space=smem, size = 0x4, offset = 0x4, fixed_abs, tag = 'smem constant byte address 0x4 - core index']
  #allocation1 [shape = 'u32[144,128]{1,0:T(1,128)}', space=vmem, size = 0x12000, scoped, tag = 'internal scratch']
  %s0 = inlined_call_operand.hbm [shape: bf16[2,8,32], index: 0, kind: input, shape index: {}]
  %s1 = inlined_call_operand.hbm [shape: bf16[32,32], index: 1, kind: input, shape index: {}]
  %s2 = inlined_call_operand.hbm [shape: f32[1,32], index: 2, kind: input, shape index: {}]
  %s3 = inlined_call_operand.hbm [shape: f32[1,1,32], index: 3, kind: input, shape index: {}]
  %s4 = inlined_call_operand.hbm [shape: f32[2,32], index: 4, kind: output, shape index: {}]
  %s5 = sld [smem:[#allocation0]]
  $region42: #{tpu_custom_call.1} parent=0
    _
  %s7 = ssub.s32 1, %s5
  %s8 = scalar_select 0, %s7, %s5
  $region1: #{tpu_custom_call.1} parent=0
    #allocation2 [shape = 'u8[4096]{0}', space=vmem, size = 0x1000, scoped, tag = 'input window, operand 0, single buffered']
    #allocation3 [shape = 's32[1]{0}', space=sflag, size = 0x4, scoped, tag = 'scoped memory for tpu_custom_call.1']
    #allocation4 [shape = 's32[1]{0}', space=sflag, size = 0x4, scoped, tag = 'scoped memory for tpu_custom_call.1']
    #allocation5 [shape = 'u8[8192]{0}', space=vmem, size = 0x2000, scoped, tag = 'input window, operand 1, single buffered']
    #allocation6 [shape = 's32[1]{0}', space=sflag, size = 0x4, scoped, tag = 'scoped memory for tpu_custom_call.1']
    #allocation7 [shape = 'u8[512]{0}', space=vmem, size = 0x400, scoped, tag = 'input window, operand 2, single buffered']
    #allocation8 [shape = 'u8[512]{0}', space=vmem, size = 0x400, scoped, tag = 'input window, operand 3, single buffered']
    #allocation9 [shape = 's32[1]{0}', space=sflag, size = 0x4, scoped, tag = 'scoped memory for tpu_custom_call.1']
    #allocation10 [shape = 'u8[1024]{0}', space=vmem, size = 0x400, scoped, tag = 'output window, operand 0, single buffered']
    %9 = vsyncpa [#allocation3], 0
    %10 = vsyncpa [#allocation6], 0
    %11 = vsyncpa [#allocation9], 0
    %12 = vsyncpa [#allocation4], 0
    // Predicated region
    $region2: #{tpu_custom_call.1} parent=1 // pred_check
      _
    $region3: #{tpu_custom_call.1} parent=1 // pred_check_branch
      %14 = sbr.rel (0) target = $region5
    $region4: #{tpu_custom_call.1} parent=1 // pred_region
      %s16 = ssub.s32 128, 128
      %17 = vsyncadd [#allocation3], %s16
      %s18 = sshll.u32 [#allocation2], 4
      %s19 = int_to_ptr.vmem [resolvable:$true] %s18
      %24 = dma.hbm_to_vmem [thread:$0]  %s0, 128, %s19, [#allocation3], 64, 64, 4
    $region5: #{tpu_custom_call.1} parent=1 // pred_fallthru
      _
    // Predicated region
    $region6: #{tpu_custom_call.1} parent=1 // pred_check
      _
    $region7: #{tpu_custom_call.1} parent=1 // pred_check_branch
      %26 = sbr.rel (0) target = $region9
    $region8: #{tpu_custom_call.1} parent=1 // pred_region
      %s28 = ssub.s32 256, 256
      %29 = vsyncadd [#allocation6], %s28
      %s30 = sshll.u32 [#allocation5], 4
      %s31 = int_to_ptr.vmem [resolvable:$true] %s30
      %36 = dma.hbm_to_vmem [thread:$0]  %s1, 256, %s31, [#allocation6], 64, 64, 4
    $region9: #{tpu_custom_call.1} parent=1 // pred_fallthru
      _
    // Predicated region
    $region10: #{tpu_custom_call.1} parent=1 // pred_check
      _
    $region11: #{tpu_custom_call.1} parent=1 // pred_check_branch
      %38 = sbr.rel (0) target = $region13
    $region12: #{tpu_custom_call.1} parent=1 // pred_region
      %s40 = ssub.s32 16, 16
      %41 = vsyncadd [#allocation6], %s40
      %s43 = sshll.u32 [#allocation7], 4
      %s44 = int_to_ptr.vmem [resolvable:$true] %s43
      %46 = dma.hbm_to_vmem [thread:$0]  %s2, 16, %s44, [#allocation6]
    $region13: #{tpu_custom_call.1} parent=1 // pred_fallthru
      _
    // Predicated region
    $region14: #{tpu_custom_call.1} parent=1 // pred_check
      _
    $region15: #{tpu_custom_call.1} parent=1 // pred_check_branch
      %48 = sbr.rel (0) target = $region17
    $region16: #{tpu_custom_call.1} parent=1 // pred_region
      %s50 = ssub.s32 16, 16
      %51 = vsyncadd [#allocation9], %s50
      %s53 = sshll.u32 [#allocation8], 4
      %s54 = int_to_ptr.vmem [resolvable:$true] %s53
      %56 = dma.hbm_to_vmem [thread:$0]  %s3, 16, %s54, [#allocation9]
    $region17: #{tpu_custom_call.1} parent=1 // pred_fallthru
      _
    // Predicated region
    $region18: #{tpu_custom_call.1} parent=1 // pred_check
      _
    $region19: #{tpu_custom_call.1} parent=1 // pred_check_branch
      %58 = sbr.rel (0) target = $region21
    $region20: #{tpu_custom_call.1} parent=1 // pred_region
      %59 = dma.done [#allocation3], 128
    $region21: #{tpu_custom_call.1} parent=1 // pred_fallthru
      _
    // Predicated region
    $region22: #{tpu_custom_call.1} parent=1 // pred_check
      _
    $region23: #{tpu_custom_call.1} parent=1 // pred_check_branch
      %61 = sbr.rel (0) target = $region25
    $region24: #{tpu_custom_call.1} parent=1 // pred_region
      %62 = dma.done [#allocation6], 256
    $region25: #{tpu_custom_call.1} parent=1 // pred_fallthru
      _
    // Predicated region
    $region26: #{tpu_custom_call.1} parent=1 // pred_check
      _
    $region27: #{tpu_custom_call.1} parent=1 // pred_check_branch
      %64 = sbr.rel (0) target = $region29
    $region28: #{tpu_custom_call.1} parent=1 // pred_region
      %65 = dma.done [#allocation6], 16
    $region29: #{tpu_custom_call.1} parent=1 // pred_fallthru
      _
    // Predicated region
    $region30: #{tpu_custom_call.1} parent=1 // pred_check
      _
    $region31: #{tpu_custom_call.1} parent=1 // pred_check_branch
      %67 = sbr.rel (0) target = $region33
    $region32: #{tpu_custom_call.1} parent=1 // pred_region
      %68 = dma.done [#allocation9], 16
    $region33: #{tpu_custom_call.1} parent=1 // pred_fallthru
      _
    %v70 = vld [vmem:[#allocation2] sm:$0xf]
    %v71 = vld [vmem:[#allocation2 + $0x4] sm:$0xf]
    %v72 = vld [vmem:[#allocation5] sm:$0xf]
    %v73 = vld [vmem:[#allocation5 + $0x4] sm:$0xf]
    %v74 = vld [vmem:[#allocation5 + $0x8] sm:$0xf]
    %v75 = vld [vmem:[#allocation5 + $0xc] sm:$0xf]
    %v76 = vld [vmem:[#allocation7] sm:$0x1]
    %v78 = vlaneseq
    %v79 = vshrl.u32 %v78, 7
    %v80 = vsub.s32 0, %v79
    %v81 = vrot.slane %v76, %v80
    %v85 = vunpack.c.l.b16 %v70
    %v86 = vunpack.c.l.b16 %v71
    %v87 = vpack.c.b16 %v86, %v85
    %v92 = vunpack.c.l.b16 %v72
    %v93 = vunpack.c.l.b16 %v73
    %v94 = vunpack.c.l.b16 %v74
    %v95 = vunpack.c.l.b16 %v75
    %v96 = vpack.c.b16 %v93, %v92
    %v97 = vpack.c.b16 %v95, %v94
    %vm100 = vcmask 261120
    %v102 = vsel %vm100, %v87, 0
    %104 = vmatprep.subr.bf16.mxu0 0
    %105 = vmatpush1.bf16.msra.mxu0 %v96
    %106 = vmatprep.subr.bf16.mxu0 0
    %107 = vmatpush1.bf16.msra.mxu0 %v97
    %108 = vmatprep.subr.bf16.mxu0 0
    %109 = vmatpush1.bf16.msra.mxu0 0
    %110 = vmatprep.subr.bf16.mxu0 0
    %111 = vmatpush1.bf16.msra.mxu0 0
    %112 = vmatprep.subr.bf16.mxu0 0
    %113 = vmatpush1.bf16.msra.mxu0 0
    %114 = vmatprep.subr.bf16.mxu0 0
    %115 = vmatpush1.bf16.msra.mxu0 0
    %116 = vmatprep.subr.bf16.mxu0 0
    %117 = vmatpush1.bf16.msra.mxu0 0
    %118 = vmatprep.subr.bf16.mxu0 0
    %119 = vmatpush1.bf16.msra.mxu0 0
    %120 = vmatprep.subr.bf16.mxu0 0
    %121 = vmatpush1.bf16.msra.mxu0 0
    %122 = vmatprep.subr.bf16.mxu0 0
    %123 = vmatpush1.bf16.msra.mxu0 0
    %124 = vmatprep.subr.bf16.mxu0 0
    %125 = vmatpush1.bf16.msra.mxu0 0
    %126 = vmatprep.subr.bf16.mxu0 0
    %127 = vmatpush1.bf16.msra.mxu0 0
    %128 = vmatprep.subr.bf16.mxu0 0
    %129 = vmatpush1.bf16.msra.mxu0 0
    %130 = vmatprep.subr.bf16.mxu0 0
    %131 = vmatpush1.bf16.msra.mxu0 0
    %132 = vmatprep.subr.bf16.mxu0 0
    %133 = vmatpush1.bf16.msra.mxu0 0
    %134 = vmatprep.subr.bf16.mxu0 0
    %135 = vmatpush1.bf16.msra.mxu0 0
    %136 = vmatprep.mubr.bf16.mxu0 0
    %137 = vmatmul.mubr.bf16.gmra.mrb[0].mxu0 %v102
    %v138 = vpop.f32.mrb[0].mxu0
    %v139 = vadd.f32 %v81, %v138
    %v140 = vpop.f32.mrb[0].mxu0
    %v141 = vpop.f32.mrb[0].mxu0
    %v142 = vadd.f32 %v81, %v141
    %v143 = vpop.f32.mrb[0].mxu0
    %144 = vdwg.mxu0
    %v145 = vtanh.pop %v139
    %v146 = vtanh.pop %v142
    %v147 = vunpack.c.l.bf16 %v70
    %v148 = vunpack.c.l.bf16 %v71
    %v149 = vld [vmem:[#allocation8] sm:$0x1]
    %v151 = vlaneseq
    %v152 = vshrl.u32 %v151, 7
    %v153 = vsub.s32 0, %v152
    %v154 = vrot.slane %v149, %v153
    %v156 = vmul.f32 %v145, %v154
    %v157 = vmul.f32 %v146, %v154
    %v158 = vsel %vm100, %v156, 0.0
    %159 = vadd.xlane.f32.xlu0 %v158
    %v160 = vpop.xlane.xlu0 %159
    %v161 = vsel %vm100, %v157, 0.0
    %162 = vadd.xlane.f32.xlu0 %v161
    %v163 = vpop.xlane.xlu0 %162
    %v164 = vrot.slane %v160, 4
    %v165 = vmax.f32 %v160, %v164
    %v166 = vrot.slane %v165, 2
    %v167 = vmax.f32 %v165, %v166
    %v168 = vrot.slane %v167, 1
    %v169 = vmax.f32 %v167, %v168
    %v170 = vrot.slane %v163, 4
    %v171 = vmax.f32 %v163, %v170
    %v172 = vrot.slane %v171, 2
    %v173 = vmax.f32 %v171, %v172
    %v174 = vrot.slane %v173, 1
    %v175 = vmax.f32 %v173, %v174
    %v176 = vsub.f32 %v160, %v169
    %v177 = vsub.f32 %v163, %v175
    %v178 = vmul.f32 %v176, 1.442695
    %v179 = vpow.pop %v178
    %v180 = vmul.f32 %v177, 1.442695
    %v181 = vpow.pop %v180
    %v182 = vrot.slane %v179, 4
    %v183 = vadd.f32 %v179, %v182
    %v184 = vrot.slane %v183, 2
    %v185 = vadd.f32 %v183, %v184
    %v186 = vrot.slane %v185, 1
    %v187 = vadd.f32 %v185, %v186
    %v188 = vrot.slane %v181, 4
    %v189 = vadd.f32 %v181, %v188
    %v190 = vrot.slane %v189, 2
    %v191 = vadd.f32 %v189, %v190
    %v192 = vrot.slane %v191, 1
    %v193 = vadd.f32 %v191, %v192
    %v194 = vrcp.pop %v187
    %v195 = vrcp.pop %v193
    %v196 = vmul.f32 %v179, %v194
    %v197 = vmul.f32 %v181, %v195
    %v198 = vmul.f32 %v196, %v147
    %v199 = vmul.f32 %v197, %v148
    %v200 = vsel %vm100, %v198, 0.0
    %v201 = vrot.slane %v200, 4
    %v202 = vadd.f32 %v200, %v201
    %v203 = vrot.slane %v202, 2
    %v204 = vadd.f32 %v202, %v203
    %v205 = vrot.slane %v204, 1
    %v206 = vadd.f32 %v204, %v205
    %v207 = vsel %vm100, %v199, 0.0
    %v208 = vrot.slane %v207, 4
    %v209 = vadd.f32 %v207, %v208
    %v210 = vrot.slane %v209, 2
    %v211 = vadd.f32 %v209, %v210
    %v212 = vrot.slane %v211, 1
    %v213 = vadd.f32 %v211, %v212
    %vm216 = vcmask 1041409
    %v217 = vsel %vm216, %v213, %v206
    %vm219 = vcmask 254976
    %220 = vst.msk [vmem:[#allocation10] sm:$0x3] %vm219, %v217
    // Predicated region
    $region34: #{tpu_custom_call.1} parent=1 // pred_check
      _
    $region35: #{tpu_custom_call.1} parent=1 // pred_check_branch
      %222 = sbr.rel (0) target = $region37
    $region36: #{tpu_custom_call.1} parent=1 // pred_region
      %s224 = ssub.s32 32, 32
      %225 = vsyncadd [#allocation4], %s224
      %s227 = sshll.u32 [#allocation10], 4
      %s228 = int_to_ptr.vmem [resolvable:$true] %s227
      %230 = dma.vmem_to_hbm [thread:$0]  %s228, 32, %s4, [#allocation4]
    $region37: #{tpu_custom_call.1} parent=1 // pred_fallthru
      _
    // Predicated region
    $region38: #{tpu_custom_call.1} parent=1 // pred_check
      _
    $region39: #{tpu_custom_call.1} parent=1 // pred_check_branch
      %232 = sbr.rel (0) target = $region41
    $region40: #{tpu_custom_call.1} parent=1 // pred_region
      %233 = dma.done [#allocation4], 32
    $region41: #{tpu_custom_call.1} parent=1 // pred_fallthru
      _
    %234 = vsyncpa [#allocation3], 1
    %235 = vsyncpa [#allocation6], 1
    %236 = vsyncpa [#allocation9], 1
    %237 = vsyncpa [#allocation4], 1

</llo_original>
